<compile_context>
chip_gen: v6e
topology: v6e:2x2x1
jax: 0.10.0
libtpu: 0.0.40
codegen_flags: <defaults>
</compile_context>

<pallas_src>
import functools
import math

import jax
import jax.numpy as jnp
from jax.experimental import pallas as pl
from jax.experimental.pallas import tpu as pltpu


def _sdpa_kernel(q_ref, k_ref, v_ref, y_ref, attn_ref, *scratch,
                 num_k_blocks, k_block, lk_valid, mask_keys, compute_dtype):
    # q_ref    : [TLQ, Dk]   bf16, pre-scaled by 1/sqrt(Dk)  (batch dim squeezed)
    # k_ref    : [TK,  Dk]   bf16
    # v_ref    : [TK,  Dv]   bf16
    # y_ref    : [TLQ, Dv]   resident across the k grid axis
    # attn_ref : [TLQ, LKP]  resident across the k grid axis (LKP = num_k_blocks*TK)
    # scratch  : () if num_k_blocks == 1 else (m, l, acc, s_scratch)
    q = q_ref[...]
    k = k_ref[...]
    v = v_ref[...]
    ki = pl.program_id(2)

    # Scores for this key tile: bf16 operands, f32 accumulation on the MXU.
    s = jax.lax.dot_general(q, k, (((1,), (1,)), ((), ())),
                            preferred_element_type=jnp.float32)
    if mask_keys:
        col = jax.lax.broadcasted_iota(jnp.int32, s.shape, 1) + ki * k_block
        s = jnp.where(col < lk_valid, s, -1e30)

    if num_k_blocks == 1:
        # Short-key fast path: one tile -> direct softmax, no scratch revisits.
        m = jnp.max(s, axis=-1, keepdims=True)
        p = jnp.exp(s - m)
        inv_l = pl.reciprocal(jnp.sum(p, axis=-1, keepdims=True), approx=True)
        attn = p * inv_l
        attn_ref[...] = attn.astype(attn_ref.dtype)
        y_ref[...] = jnp.dot(attn.astype(compute_dtype), v,
                             preferred_element_type=jnp.float32).astype(y_ref.dtype)
        return

    m_ref, l_ref, acc_ref, s_scratch = scratch

    @pl.when(ki == 0)
    def _init():
        m_ref[...] = jnp.full(m_ref.shape, -jnp.inf, jnp.float32)
        l_ref[...] = jnp.zeros_like(l_ref)
        acc_ref[...] = jnp.zeros_like(acc_ref)

    # Stash raw scores (normalized in one shot at the last k step).
    s_scratch[ki] = s

    # Online-softmax (flash) accumulation for y.
    m_prev = m_ref[...]
    m_new = jnp.maximum(m_prev, jnp.max(s, axis=-1, keepdims=True))
    alpha = jnp.exp(m_prev - m_new)
    p = jnp.exp(s - m_new)
    l_ref[...] = alpha * l_ref[...] + jnp.sum(p, axis=-1, keepdims=True)
    acc_ref[...] = alpha * acc_ref[...] + jnp.dot(
        p.astype(compute_dtype), v, preferred_element_type=jnp.float32)
    m_ref[...] = m_new

    @pl.when(ki == num_k_blocks - 1)
    def _finalize():
        m_fin = m_ref[...]
        inv_l = pl.reciprocal(l_ref[...], approx=True)
        # Normalize stashed scores tile by tile (static, 128-aligned lane slices).
        for j in range(num_k_blocks):
            attn_j = jnp.exp(s_scratch[j] - m_fin) * inv_l
            attn_ref[:, j * k_block:(j + 1) * k_block] = attn_j.astype(attn_ref.dtype)
        y_ref[...] = (acc_ref[...] * inv_l).astype(y_ref.dtype)


def _round_up(x, m):
    return (x + m - 1) // m * m


def _pad_rows(x, rows):
    if x.shape[1] == rows:
        return x
    return jnp.pad(x, ((0, 0), (0, rows - x.shape[1]), (0, 0)))


def scaled_dot_product_attention(Q, K, V, *, q_tile=256, k_tile=512,
                                 compute_dtype=jnp.bfloat16, attn_dtype=None):
    """
    Q : [B, Lq, Dk], K : [B, Lk, Dk], V : [B, Lk, Dv]
    returns (y [B, Lq, Dv], attn [B, Lq, Lk]) — matches the PyTorch forward.
    """
    # TODO(synk): nn.Dropout(0.5) is treated as eval-mode identity; train-mode
    # RNG dropout on the attention map is not applied inside the kernel.
    B, Lq, Dk = Q.shape
    _, Lk, _ = K.shape
    _, _, Dv = V.shape
    out_dtype = Q.dtype
    attn_dtype = out_dtype if attn_dtype is None else jnp.dtype(attn_dtype)
    scale = 1.0 / math.sqrt(Dk)

    # ---- tiling (Dk/Dv unpadded: full-array block dims bypass the 8x128 rule)
    q_tile = _round_up(q_tile, 8)
    k_tile = _round_up(k_tile, 128)
    if Lq <= q_tile:
        tlq = _round_up(Lq, 8)
        lq_p = tlq
    else:
        tlq = q_tile
        lq_p = _round_up(Lq, tlq)
    tk = min(k_tile, _round_up(Lk, 128))
    lk_p = _round_up(Lk, tk)
    nq = lq_p // tlq
    nk = lk_p // tk

    # ---- operand prep: fold 1/sqrt(dk) into Q; bf16 MXU operands; pad rows only
    Qs = _pad_rows((Q * scale).astype(compute_dtype), lq_p)
    Ks = _pad_rows(K.astype(compute_dtype), lk_p)
    Vs = _pad_rows(V.astype(compute_dtype), lk_p)

    kernel = functools.partial(
        _sdpa_kernel, num_k_blocks=nk, k_block=tk, lk_valid=Lk,
        mask_keys=(lk_p != Lk), compute_dtype=compute_dtype)

    scratch_shapes = []
    if nk > 1:
        scratch_shapes = [
            pltpu.VMEM((tlq, 1), jnp.float32),       # running row max
            pltpu.VMEM((tlq, 1), jnp.float32),       # running denominator
            pltpu.VMEM((tlq, Dv), jnp.float32),      # y accumulator
            pltpu.VMEM((nk, tlq, tk), jnp.float32),  # stashed scores
        ]

    c_item = jnp.dtype(compute_dtype).itemsize
    a_item = jnp.dtype(attn_dtype).itemsize
    o_item = jnp.dtype(out_dtype).itemsize

    cost = pl.CostEstimate(
        flops=int(2 * B * lq_p * lk_p * (Dk + Dv)),
        transcendentals=int(2 * B * lq_p * lk_p),
        bytes_accessed=int((Qs.size + Ks.size + Vs.size) * c_item
                           + B * lq_p * Dv * o_item
                           + B * lq_p * lk_p * a_item),
    )

    # Rough per-core VMEM need: double-buffered tiles + resident blocks + scratch.
    vmem_need = (
        2 * tlq * Dk * c_item
        + 2 * tk * (Dk + Dv) * c_item
        + 2 * tlq * Dv * o_item
        + 2 * tlq * lk_p * a_item
        + (tlq * (Dv + 2) + nk * tlq * tk) * 4
    )
    vmem_limit = int(min(128 * 2 ** 20, max(32 * 2 ** 20, 2 * vmem_need)))

    y_p, attn_p = pl.pallas_call(
        kernel,
        out_shape=(
            jax.ShapeDtypeStruct((B, lq_p, Dv), out_dtype),
            jax.ShapeDtypeStruct((B, lq_p, lk_p), attn_dtype),
        ),
        grid_spec=pltpu.PrefetchScalarGridSpec(
            num_scalar_prefetch=0,
            grid=(B, nq, nk),
            in_specs=[
                pl.BlockSpec((pl.Squeezed(), tlq, Dk), lambda b, qi, ki: (b, qi, 0)),
                pl.BlockSpec((pl.Squeezed(), tk, Dk), lambda b, qi, ki: (b, ki, 0)),
                pl.BlockSpec((pl.Squeezed(), tk, Dv), lambda b, qi, ki: (b, ki, 0)),
            ],
            out_specs=[
                pl.BlockSpec((pl.Squeezed(), tlq, Dv), lambda b, qi, ki: (b, qi, 0)),
                pl.BlockSpec((pl.Squeezed(), tlq, lk_p), lambda b, qi, ki: (b, qi, 0)),
            ],
            scratch_shapes=scratch_shapes,
        ),
        compiler_params=pltpu.CompilerParams(
            dimension_semantics=("parallel", "parallel", "arbitrary"),
            vmem_limit_bytes=vmem_limit),
        cost_estimate=cost,
    )(Qs, Ks, Vs)

    y = y_p if lq_p == Lq else y_p[:, :Lq]
    attn = attn_p
    if lq_p != Lq:
        attn = attn[:, :Lq]
    if lk_p != Lk:
        attn = attn[:, :, :Lk]
    return y, attn


def _reference(Q, K, V):
    d_k = Q.shape[-1]
    attn = jnp.einsum('bqd,bkd->bqk', Q, K) / math.sqrt(d_k)
    attn = jax.nn.softmax(attn, axis=-1)
    y = jnp.einsum('bqk,bkd->bqd', attn, V)
    return y, attn


def _check(B, Lq, Lk, Dk, Dv, seed=0, **kw):
    key = jax.random.PRNGKey(seed)
    kq, kk, kv = jax.random.split(key, 3)
    Q = jax.random.normal(kq, (B, Lq, Dk), dtype=jnp.float32)
    K = jax.random.normal(kk, (B, Lk, Dk), dtype=jnp.float32)
    V = jax.random.normal(kv, (B, Lk, Dv), dtype=jnp.float32)

    y, attn = scaled_dot_product_attention(Q, K, V, **kw)
    y = jax.block_until_ready(y)
    attn = jax.block_until_ready(attn)

    y_exp, attn_exp = _reference(Q, K, V)
    assert y.shape == (B, Lq, Dv) and attn.shape == (B, Lq, Lk)
    # bf16 MXU operands + approx reciprocal -> slightly looser than f32 parity.
    assert jnp.allclose(attn, attn_exp, atol=2e-2, rtol=2e-2), "attn mismatch"
    assert jnp.allclose(y, y_exp, atol=2e-2, rtol=2e-2), "y mismatch"
    assert jnp.allclose(jnp.sum(attn, axis=-1), 1.0, atol=1e-2), "attn not normalized"


if __name__ == "__main__":
    # Small shapes consistent with the module (single k tile, fast path).
    _check(B=2, Lq=16, Lk=8, Dk=32, Dv=32, seed=0)
    # Exercise the tiled path: multiple q tiles, multiple k tiles, masked padding.
    _check(B=2, Lq=200, Lk=320, Dk=64, Dv=48, seed=0, q_tile=128, k_tile=128)
    print("KERNEL_OK")
</pallas_src>

<mosaic_0001>
module attributes {stable_mosaic.version = 11 : i64} {
  func.func @_sdpa_kernel(%arg0: i32, %arg1: i32, %arg2: i32, %arg3: memref<1x16x32xbf16, #tpu.memory_space<vmem>>, %arg4: memref<1x128x32xbf16, #tpu.memory_space<vmem>>, %arg5: memref<1x128x32xbf16, #tpu.memory_space<vmem>>, %arg6: memref<1x16x32xf32, #tpu.memory_space<vmem>>, %arg7: memref<1x16x128xf32, #tpu.memory_space<vmem>>) attributes {dimension_semantics = [#tpu.dimension_semantics<parallel>, #tpu.dimension_semantics<parallel>, #tpu.dimension_semantics<arbitrary>], iteration_bounds = array<i64: 2, 1, 1>, scalar_prefetch = 0 : i64, scratch_operands = 0 : i64, tpu.core_type = #tpu.core_type<tc>, window_params = [{transform_indices = @transform_0, window_bounds = array<i64: 1, 16, 32>}, {transform_indices = @transform_1, window_bounds = array<i64: 1, 128, 32>}, {transform_indices = @transform_2, window_bounds = array<i64: 1, 128, 32>}, {transform_indices = @transform_3, window_bounds = array<i64: 1, 16, 32>}, {transform_indices = @transform_4, window_bounds = array<i64: 1, 16, 128>}]} {
    %c0 = arith.constant 0 : index
    %c0_0 = arith.constant 0 : index
    %c0_1 = arith.constant 0 : index
    %0 = vector.load %arg3[%c0, %c0_0, %c0_1] : memref<1x16x32xbf16, #tpu.memory_space<vmem>>, vector<1x16x32xbf16>
    %1 = vector.shape_cast %0 : vector<1x16x32xbf16> to vector<16x32xbf16>
    %c0_2 = arith.constant 0 : index
    %c0_3 = arith.constant 0 : index
    %c0_4 = arith.constant 0 : index
    %2 = vector.load %arg4[%c0_2, %c0_3, %c0_4] : memref<1x128x32xbf16, #tpu.memory_space<vmem>>, vector<1x128x32xbf16>
    %3 = vector.shape_cast %2 : vector<1x128x32xbf16> to vector<128x32xbf16>
    %c0_5 = arith.constant 0 : index
    %c0_6 = arith.constant 0 : index
    %c0_7 = arith.constant 0 : index
    %4 = vector.load %arg5[%c0_5, %c0_6, %c0_7] : memref<1x128x32xbf16, #tpu.memory_space<vmem>>, vector<1x128x32xbf16>
    %5 = vector.shape_cast %4 : vector<1x128x32xbf16> to vector<128x32xbf16>
    %cst = arith.constant dense<0.000000e+00> : vector<16x128xf32>
    %6 = tpu.matmul %1, %3, %cst {dimension_numbers = #tpu.dot_dimension_numbers<[1], [1], [0], [0], [0, 0, 1, 0], [], []>} : vector<16x32xbf16>, vector<128x32xbf16>, vector<16x128xf32> -> vector<16x128xf32>
    %7 = tpu.iota {dimensions = array<i32: 1>} : vector<16x128xi32>
    %c128_i32 = arith.constant 128 : i32
    %8 = arith.muli %arg2, %c128_i32 : i32
    %9 = vector.broadcast %8 : i32 to vector<16x128xi32>
    %10 = arith.addi %7, %9 : vector<16x128xi32>
    %c8_i32 = arith.constant 8 : i32
    %11 = vector.broadcast %c8_i32 : i32 to vector<16x128xi32>
    %12 = arith.cmpi slt, %10, %11 : vector<16x128xi32>
    %cst_8 = arith.constant -1.000000e+30 : f32
    %13 = vector.broadcast %cst_8 : f32 to vector<16x128xf32>
    %14 = arith.select %12, %6, %13 : vector<16x128xi1>, vector<16x128xf32>
    %cst_9 = arith.constant dense<0xFF800000> : vector<16xf32>
    %15 = vector.multi_reduction <maximumf>, %14, %cst_9 [1] : vector<16x128xf32> to vector<16xf32>
    %16 = vector.shape_cast %15 : vector<16xf32> to vector<16x1xf32>
    %17 = vector.broadcast %16 : vector<16x1xf32> to vector<16x128xf32>
    %18 = arith.subf %14, %17 : vector<16x128xf32>
    %19 = math.exp %18 : vector<16x128xf32>
    %cst_10 = arith.constant dense<0.000000e+00> : vector<16xf32>
    %20 = vector.multi_reduction <add>, %19, %cst_10 [1] : vector<16x128xf32> to vector<16xf32>
    %21 = vector.shape_cast %20 : vector<16xf32> to vector<16x1xf32>
    %22 = tpu.reciprocal %21 {approx = true} : vector<16x1xf32> -> vector<16x1xf32>
    %23 = vector.broadcast %22 : vector<16x1xf32> to vector<16x128xf32>
    %24 = arith.mulf %19, %23 : vector<16x128xf32>
    %c0_11 = arith.constant 0 : index
    %c0_12 = arith.constant 0 : index
    %c0_13 = arith.constant 0 : index
    %25 = vector.load %arg7[%c0_11, %c0_12, %c0_13] : memref<1x16x128xf32, #tpu.memory_space<vmem>>, vector<1x16x128xf32>
    %26 = vector.shape_cast %25 : vector<1x16x128xf32> to vector<16x128xf32>
    %27 = vector.shape_cast %24 : vector<16x128xf32> to vector<1x16x128xf32>
    tpu.vector_store %arg7[%c0_11, %c0_12, %c0_13], %27 {strides = array<i32>} : memref<1x16x128xf32, #tpu.memory_space<vmem>>, vector<1x16x128xf32>,
    %28 = arith.truncf %24 : vector<16x128xf32> to vector<16x128xbf16>
    %cst_14 = arith.constant dense<0.000000e+00> : vector<16x32xf32>
    %29 = tpu.matmul %28, %5, %cst_14 {dimension_numbers = #tpu.dot_dimension_numbers<[1], [0], [0], [1], [0, 0, 1, 1], [], []>} : vector<16x128xbf16>, vector<128x32xbf16>, vector<16x32xf32> -> vector<16x32xf32>
    %c0_15 = arith.constant 0 : index
    %c0_16 = arith.constant 0 : index
    %c0_17 = arith.constant 0 : index
    %30 = vector.load %arg6[%c0_15, %c0_16, %c0_17] : memref<1x16x32xf32, #tpu.memory_space<vmem>>, vector<1x16x32xf32>
    %31 = vector.shape_cast %30 : vector<1x16x32xf32> to vector<16x32xf32>
    %32 = vector.shape_cast %29 : vector<16x32xf32> to vector<1x16x32xf32>
    tpu.vector_store %arg6[%c0_15, %c0_16, %c0_17], %32 {strides = array<i32>} : memref<1x16x32xf32, #tpu.memory_space<vmem>>, vector<1x16x32xf32>,
    return
  }
  func.func @transform_0(%arg0: i32, %arg1: i32, %arg2: i32) -> (i32, i32, i32) {
    %c0_i32 = arith.constant 0 : i32
    %c0_i32_0 = arith.constant 0 : i32
    return %arg0, %arg1, %c0_i32 : i32, i32, i32
  }
  func.func @transform_1(%arg0: i32, %arg1: i32, %arg2: i32) -> (i32, i32, i32) {
    %c0_i32 = arith.constant 0 : i32
    %c0_i32_0 = arith.constant 0 : i32
    return %arg0, %arg2, %c0_i32 : i32, i32, i32
  }
  func.func @transform_2(%arg0: i32, %arg1: i32, %arg2: i32) -> (i32, i32, i32) {
    %c0_i32 = arith.constant 0 : i32
    %c0_i32_0 = arith.constant 0 : i32
    return %arg0, %arg2, %c0_i32 : i32, i32, i32
  }
  func.func @transform_3(%arg0: i32, %arg1: i32, %arg2: i32) -> (i32, i32, i32) {
    %c0_i32 = arith.constant 0 : i32
    %c0_i32_0 = arith.constant 0 : i32
    return %arg0, %arg1, %c0_i32 : i32, i32, i32
  }
  func.func @transform_4(%arg0: i32, %arg1: i32, %arg2: i32) -> (i32, i32, i32) {
    %c0_i32 = arith.constant 0 : i32
    %c0_i32_0 = arith.constant 0 : i32
    return %arg0, %arg1, %c0_i32 : i32, i32, i32
  }
}

</mosaic_0001>

<llo_original>
// kernel: tpu_custom_call.1
$region0: #{tpu_custom_call.1}
  #allocation0 [shape = 'u32[]', space=smem, size = 0x4, offset = 0x4, fixed_abs, tag = 'smem constant byte address 0x4 - core index']
  #allocation1 [shape = 'u32[144,128]{1,0:T(1,128)}', space=vmem, size = 0x12000, scoped, tag = 'internal scratch']
  %s0 = inlined_call_operand.vmem [shape: bf16[2,16,32], index: 0, kind: input, shape index: {}]
  %s1 = inlined_call_operand.vmem [shape: bf16[2,128,32], index: 1, kind: input, shape index: {}]
  %s2 = inlined_call_operand.vmem [shape: bf16[2,128,32], index: 2, kind: input, shape index: {}]
  %s3 = inlined_call_operand.hbm [shape: f32[2,16,32], index: 3, kind: output, shape index: {0}]
  %s4 = inlined_call_operand.hbm [shape: f32[2,16,128], index: 4, kind: output, shape index: {1}]
  %5 = xla_tuple %s3, %s4
  %s6 = sld [smem:[#allocation0]]
  $region53: #{tpu_custom_call.1} parent=0
    _
  %s8 = ssub.s32 1, %s6
  %s9 = scalar_select 0, %s8, %s6
  $region1: #{tpu_custom_call.1} parent=0
    #allocation2 [shape = 'u8[16384]{0}', space=vmem, size = 0x4000, scoped, tag = 'output window, operand 0']
    #allocation3 [shape = 's32[2]{0}', space=sflag, size = 0x8, scoped, tag = 'scoped memory for tpu_custom_call.1']
    #allocation4 [shape = 'u8[16384]{0}', space=vmem, size = 0x4000, scoped, tag = 'output window, operand 1']
    #allocation5 [shape = 's32[2]{0}', space=sflag, size = 0x8, scoped, tag = 'scoped memory for tpu_custom_call.1']
    %10 = vsyncpa [#allocation3], 0
    %s11 = scalar_lea.sflag [#allocation3], 1
    %12 = vsyncpa %s11, 0
    %13 = vsyncpa [#allocation5], 0
    %s14 = scalar_lea.sflag [#allocation5], 1
    %15 = vsyncpa %s14, 0
    loop: start=0, step=1, limit=4
    $region2: #{tpu_custom_call.1} parent=1 // loop_pre_header
      _
    $region3: #{tpu_custom_call.1} parent=1 // loop_header
      %s17 = sphi 0, %s21
      %p18 = scmp.ge.s32.totalorder %s17, 4
      %s24 = sphi 0, %s43
      %s25 = sphi 0, %s39
      %s26 = sphi 0, %s35
      %s27 = sphi 0, %s24
      %s28 = sphi 0, %s25
      %s29 = sphi 0, %s26
      %s30 = sphi 0, %s27
      %s31 = sphi 0, %s28
      %s32 = sphi 0, %s29
      %s48 = sphi 0, %s50
      %s51 = sphi 0, %s48
      %s52 = sphi 0, %s51
      %s68 = sphi 0, %s52
      %s76 = sphi 0, %s78
      %s79 = sphi 0, %s76
      %s80 = sphi 0, %s79
      %s96 = sphi 0, %s80
      %s104 = sphi 0, %s106
      %s107 = sphi 0, %s104
      %s108 = sphi 0, %s107
      %s124 = sphi 0, %s108
      %s132 = sphi 0, %s134
      %s135 = sphi 0, %s132
      %s136 = sphi 0, %s135
      %s152 = sphi 0, %s136
      %s160 = sphi 0, %s162
      %s163 = sphi 0, %s160
      %s164 = sphi 0, %s163
      %s180 = sphi 0, %s164
    $region4: #{tpu_custom_call.1} parent=1 // loop_header_branch
      %20 = sbr.rel (%p18) target = $region8
    $region5: #{tpu_custom_call.1} parent=1 // loop_body
      %s22 = ssub.s32 %s17, 1
      %s23 = ssub.s32 %s17, 2
      %s33 = sadd.s32 1, %s26
      %p34 = scmp.ge.s32.totalorder %s33, 1
      %s35 = scalar_select %p34, 0, %s33
      %s36 = sadd.s32 1, %s25
      %s37 = scalar_select %p34, %s36, %s25
      %p38 = scmp.ge.s32.totalorder %s37, 1
      %s39 = scalar_select %p38, 0, %s37
      %s40 = sadd.s32 1, %s24
      %s41 = scalar_select %p38, %s40, %s24
      %p42 = scmp.ge.s32.totalorder %s41, 2
      %s43 = scalar_select %p42, 0, %s41
      %s44 = ssub.s32 %s24, %s43
      %s45 = ssub.s32 %s25, %s39
      %s46 = sor.u32 %s44, %s45
      %p47 = scmp.eq.s32.totalorder %s46, 0
      %s49 = sadd.s32 %s48, 1
      %s50 = scalar_select %p47, %s48, %s49
      %p53 = pneg %p47
      %p54 = scmp.eq.s32.totalorder %s17, 1
      %p55 = por %p53, %p54
      %p56 = scmp.ne.s32.totalorder %s48, %s51
      %p57 = scmp.eq.s32.totalorder %s17, 0
      %p58 = por %p56, %p57
      %p59 = scmp.ne.s32.totalorder %s48, %s51
      %p60 = scmp.eq.s32.totalorder %s22, 1
      %p61 = por %p59, %p60
      %p62 = scmp.ne.s32.totalorder %s51, %s52
      %p63 = scmp.eq.s32.totalorder %s22, 0
      %p64 = por %p62, %p63
      %p65 = scmp.ne.s32.totalorder %s51, %s52
      %p66 = scmp.eq.s32.totalorder %s23, 1
      %p67 = por %p65, %p66
      %p69 = scmp.ne.s32.totalorder %s52, %s68
      %p70 = scmp.eq.s32.totalorder %s23, 0
      %p71 = por %p69, %p70
      %s72 = ssub.s32 %s24, %s43
      %s73 = ssub.s32 %s26, %s35
      %s74 = sor.u32 %s72, %s73
      %p75 = scmp.eq.s32.totalorder %s74, 0
      %s77 = sadd.s32 %s76, 1
      %s78 = scalar_select %p75, %s76, %s77
      %p81 = pneg %p75
      %p82 = scmp.eq.s32.totalorder %s17, 1
      %p83 = por %p81, %p82
      %p84 = scmp.ne.s32.totalorder %s76, %s79
      %p85 = scmp.eq.s32.totalorder %s17, 0
      %p86 = por %p84, %p85
      %p87 = scmp.ne.s32.totalorder %s76, %s79
      %p88 = scmp.eq.s32.totalorder %s22, 1
      %p89 = por %p87, %p88
      %p90 = scmp.ne.s32.totalorder %s79, %s80
      %p91 = scmp.eq.s32.totalorder %s22, 0
      %p92 = por %p90, %p91
      %p93 = scmp.ne.s32.totalorder %s79, %s80
      %p94 = scmp.eq.s32.totalorder %s23, 1
      %p95 = por %p93, %p94
      %p97 = scmp.ne.s32.totalorder %s80, %s96
      %p98 = scmp.eq.s32.totalorder %s23, 0
      %p99 = por %p97, %p98
      %s100 = ssub.s32 %s24, %s43
      %s101 = ssub.s32 %s26, %s35
      %s102 = sor.u32 %s100, %s101
      %p103 = scmp.eq.s32.totalorder %s102, 0
      %s105 = sadd.s32 %s104, 1
      %s106 = scalar_select %p103, %s104, %s105
      %p109 = pneg %p103
      %p110 = scmp.eq.s32.totalorder %s17, 1
      %p111 = por %p109, %p110
      %p112 = scmp.ne.s32.totalorder %s104, %s107
      %p113 = scmp.eq.s32.totalorder %s17, 0
      %p114 = por %p112, %p113
      %p115 = scmp.ne.s32.totalorder %s104, %s107
      %p116 = scmp.eq.s32.totalorder %s22, 1
      %p117 = por %p115, %p116
      %p118 = scmp.ne.s32.totalorder %s107, %s108
      %p119 = scmp.eq.s32.totalorder %s22, 0
      %p120 = por %p118, %p119
      %p121 = scmp.ne.s32.totalorder %s107, %s108
      %p122 = scmp.eq.s32.totalorder %s23, 1
      %p123 = por %p121, %p122
      %p125 = scmp.ne.s32.totalorder %s108, %s124
      %p126 = scmp.eq.s32.totalorder %s23, 0
      %p127 = por %p125, %p126
      %s128 = ssub.s32 %s24, %s43
      %s129 = ssub.s32 %s25, %s39
      %s130 = sor.u32 %s128, %s129
      %p131 = scmp.eq.s32.totalorder %s130, 0
      %s133 = sadd.s32 %s132, 1
      %s134 = scalar_select %p131, %s132, %s133
      %p137 = pneg %p131
      %p138 = scmp.eq.s32.totalorder %s17, 1
      %p139 = por %p137, %p138
      %p140 = scmp.ne.s32.totalorder %s132, %s135
      %p141 = scmp.eq.s32.totalorder %s17, 0
      %p142 = por %p140, %p141
      %p143 = scmp.ne.s32.totalorder %s132, %s135
      %p144 = scmp.eq.s32.totalorder %s22, 1
      %p145 = por %p143, %p144
      %p146 = scmp.ne.s32.totalorder %s135, %s136
      %p147 = scmp.eq.s32.totalorder %s22, 0
      %p148 = por %p146, %p147
      %p149 = scmp.ne.s32.totalorder %s135, %s136
      %p150 = scmp.eq.s32.totalorder %s23, 1
      %p151 = por %p149, %p150
      %p153 = scmp.ne.s32.totalorder %s136, %s152
      %p154 = scmp.eq.s32.totalorder %s23, 0
      %p155 = por %p153, %p154
      %s156 = ssub.s32 %s24, %s43
      %s157 = ssub.s32 %s25, %s39
      %s158 = sor.u32 %s156, %s157
      %p159 = scmp.eq.s32.totalorder %s158, 0
      %s161 = sadd.s32 %s160, 1
      %s162 = scalar_select %p159, %s160, %s161
      %p165 = pneg %p159
      %p166 = scmp.eq.s32.totalorder %s17, 1
      %p167 = por %p165, %p166
      %p168 = scmp.ne.s32.totalorder %s160, %s163
      %p169 = scmp.eq.s32.totalorder %s17, 0
      %p170 = por %p168, %p169
      %p171 = scmp.ne.s32.totalorder %s160, %s163
      %p172 = scmp.eq.s32.totalorder %s22, 1
      %p173 = por %p171, %p172
      %p174 = scmp.ne.s32.totalorder %s163, %s164
      %p175 = scmp.eq.s32.totalorder %s22, 0
      %p176 = por %p174, %p175
      %p177 = scmp.ne.s32.totalorder %s163, %s164
      %p178 = scmp.eq.s32.totalorder %s23, 1
      %p179 = por %p177, %p178
      %p181 = scmp.ne.s32.totalorder %s164, %s180
      %p182 = scmp.eq.s32.totalorder %s23, 0
      %p183 = por %p181, %p182
      %p184 = scmp.le.s32.totalorder 1, %s17
      %p185 = scmp.lt.s32.totalorder %s17, 3
      %p186 = pnand %p184, %p185
      %p187 = pneg %p186
      // Predicated region
      $region9: #{tpu_custom_call.1} parent=5 // pred_check
        _
      $region10: #{tpu_custom_call.1} parent=5 // pred_check_branch
        %189 = sbr.rel (%p186) target = $region12
      $region11: #{tpu_custom_call.1} parent=5 // pred_region
        %s190 = ssub.s32 %s17, 1
      $region12: #{tpu_custom_call.1} parent=5 // pred_fallthru
        _
      %p191 = scmp.lt.s32.totalorder %s17, 2
      // Predicated region
      $region13: #{tpu_custom_call.1} parent=5 // pred_check
        %p192 = pneg %p191
      $region14: #{tpu_custom_call.1} parent=5 // pred_check_branch
        %194 = sbr.rel (%p192) target = $region16
      $region15: #{tpu_custom_call.1} parent=5 // pred_region
        // Predicated region
        $region17: #{tpu_custom_call.1} parent=15 // pred_check
          %p195 = pneg %p58
        $region18: #{tpu_custom_call.1} parent=15 // pred_check_branch
          %197 = sbr.rel (%p195) target = $region20
        $region19: #{tpu_custom_call.1} parent=15 // pred_region
          %s198 = smul.u32 2, %s25
          %p199 = scmp.lt.s32.totalorder %s24, 1
          %s200 = scalar_select %p199, %s24, 1
          %p201 = scmp.lt.s32.totalorder %s198, 1
          %s202 = scalar_select %p201, %s198, 1
          %s203 = smul.addr %s200, 2
          %s204 = sadd.s32 %s202, %s203
          %s205 = smul.addr %s204, 4
          %s206 = scalar_lea.vmem %s0, %s205
          %s207 = smul.u32 2, %s25
        $region20: #{tpu_custom_call.1} parent=15 // pred_fallthru
          _
        // Predicated region
        $region21: #{tpu_custom_call.1} parent=15 // pred_check
          %p208 = pneg %p86
        $region22: #{tpu_custom_call.1} parent=15 // pred_check_branch
          %210 = sbr.rel (%p208) target = $region24
        $region23: #{tpu_custom_call.1} parent=15 // pred_region
          %s211 = smul.u32 16, %s26
          %p212 = scmp.lt.s32.totalorder %s24, 1
          %s213 = scalar_select %p212, %s24, 1
          %p214 = scmp.lt.s32.totalorder %s211, 15
          %s215 = scalar_select %p214, %s211, 15
          %s216 = smul.addr %s213, 16
          %s217 = sadd.s32 %s215, %s216
          %s218 = smul.addr %s217, 4
          %s219 = scalar_lea.vmem %s1, %s218
          %s220 = smul.u32 16, %s26
        $region24: #{tpu_custom_call.1} parent=15 // pred_fallthru
          _
        // Predicated region
        $region25: #{tpu_custom_call.1} parent=15 // pred_check
          %p221 = pneg %p114
        $region26: #{tpu_custom_call.1} parent=15 // pred_check_branch
          %223 = sbr.rel (%p221) target = $region28
        $region27: #{tpu_custom_call.1} parent=15 // pred_region
          %s224 = smul.u32 16, %s26
          %p225 = scmp.lt.s32.totalorder %s24, 1
          %s226 = scalar_select %p225, %s24, 1
          %p227 = scmp.lt.s32.totalorder %s224, 15
          %s228 = scalar_select %p227, %s224, 15
          %s229 = smul.addr %s226, 16
          %s230 = sadd.s32 %s228, %s229
          %s231 = smul.addr %s230, 4
          %s232 = scalar_lea.vmem %s2, %s231
          %s233 = smul.u32 16, %s26
        $region28: #{tpu_custom_call.1} parent=15 // pred_fallthru
          _
      $region16: #{tpu_custom_call.1} parent=5 // pred_fallthru
        _
      %p234 = scmp.le.s32.totalorder 1, %s17
      %p235 = scmp.lt.s32.totalorder %s17, 3
      %p236 = pnand %p234, %p235
      %p237 = pneg %p236
      // Predicated region
      $region29: #{tpu_custom_call.1} parent=5 // pred_check
        _
      $region30: #{tpu_custom_call.1} parent=5 // pred_check_branch
        %239 = sbr.rel (%p236) target = $region32
      $region31: #{tpu_custom_call.1} parent=5 // pred_region
        %s240 = ssub.s32 %s17, 1
        %s241 = smul.u32 2, %s28
        %p242 = scmp.lt.s32.totalorder %s27, 1
        %s243 = scalar_select %p242, %s27, 1
        %p244 = scmp.lt.s32.totalorder %s241, 1
        %s245 = scalar_select %p244, %s241, 1
        %s246 = smul.addr %s243, 2
        %s247 = sadd.s32 %s245, %s246
        %s248 = smul.addr %s247, 4
        %s249 = scalar_lea.vmem %s0, %s248
        %p250 = pneg %p64
        %p251 = pneg %p61
        %s252 = smul.u32 16, %s29
        %p253 = scmp.lt.s32.totalorder %s27, 1
        %s254 = scalar_select %p253, %s27, 1
        %p255 = scmp.lt.s32.totalorder %s252, 15
        %s256 = scalar_select %p255, %s252, 15
        %s257 = smul.addr %s254, 16
        %s258 = sadd.s32 %s256, %s257
        %s259 = smul.addr %s258, 4
        %s260 = scalar_lea.vmem %s1, %s259
        %p261 = pneg %p92
        %p262 = pneg %p89
        %s263 = smul.u32 16, %s29
        %p264 = scmp.lt.s32.totalorder %s27, 1
        %s265 = scalar_select %p264, %s27, 1
        %p266 = scmp.lt.s32.totalorder %s263, 15
        %s267 = scalar_select %p266, %s263, 15
        %s268 = smul.addr %s265, 16
        %s269 = sadd.s32 %s267, %s268
        %s270 = smul.addr %s269, 4
        %s271 = scalar_lea.vmem %s2, %s270
        %p272 = pneg %p120
        %p273 = pneg %p117
        %p274 = pneg %p148
        %p275 = pneg %p145
        %s276 = sand.u32 %s135, 1
        %s277 = scalar_lea.sflag [#allocation3], %s276
        %s278 = sand.u32 %s135, 1
        %s279 = smul.addr %s278, 16
        %s280 = scalar_lea.vmem [#allocation2], %s279
        %p281 = pneg %p176
        %p282 = pneg %p173
        %s283 = sand.u32 %s163, 1
        %s284 = scalar_lea.sflag [#allocation5], %s283
        %s285 = sand.u32 %s163, 1
        %s286 = smul.addr %s285, 16
        %s287 = scalar_lea.vmem [#allocation4], %s286
        %s288 = smul.u32 2, %s28
        %p289 = scmp.lt.s32.totalorder %s27, 1
        %s290 = scalar_select %p289, %s27, 1
        %p291 = scmp.lt.s32.totalorder %s288, 1
        %s292 = scalar_select %p291, %s288, 1
        %s293 = smul.addr %s290, 2
        %s294 = sadd.s32 %s292, %s293
        %s295 = smul.addr %s294, 4
        %s296 = scalar_lea.vmem %s0, %s295
        %s297 = smul.u32 2, %s28
        %s298 = smul.u32 16, %s29
        %p299 = scmp.lt.s32.totalorder %s27, 1
        %s300 = scalar_select %p299, %s27, 1
        %p301 = scmp.lt.s32.totalorder %s298, 15
        %s302 = scalar_select %p301, %s298, 15
        %s303 = smul.addr %s300, 16
        %s304 = sadd.s32 %s302, %s303
        %s305 = smul.addr %s304, 4
        %s306 = scalar_lea.vmem %s1, %s305
        %s307 = smul.u32 16, %s29
        %s308 = smul.u32 16, %s29
        %p309 = scmp.lt.s32.totalorder %s27, 1
        %s310 = scalar_select %p309, %s27, 1
        %p311 = scmp.lt.s32.totalorder %s308, 15
        %s312 = scalar_select %p311, %s308, 15
        %s313 = smul.addr %s310, 16
        %s314 = sadd.s32 %s312, %s313
        %s315 = smul.addr %s314, 4
        %s316 = scalar_lea.vmem %s2, %s315
        %s317 = smul.u32 16, %s29
        %s318 = smul.u32 2, %s28
        %s319 = smul.u32 2, %s28
        %v321 = vld [vmem:[%s296] sm:$0xf]
        %v322 = vld [vmem:[%s296 + $0x4] sm:$0xf]
        %v323 = vld [vmem:[%s306] sm:$0xf]
        %v324 = vld [vmem:[%s306 + $0x4] sm:$0xf]
        %v325 = vld [vmem:[%s306 + $0x8] sm:$0xf]
        %v326 = vld [vmem:[%s306 + $0xc] sm:$0xf]
        %v327 = vld [vmem:[%s306 + $0x10] sm:$0xf]
        %v328 = vld [vmem:[%s306 + $0x14] sm:$0xf]
        %v329 = vld [vmem:[%s306 + $0x18] sm:$0xf]
        %v330 = vld [vmem:[%s306 + $0x1c] sm:$0xf]
        %v331 = vld [vmem:[%s306 + $0x20] sm:$0xf]
        %v332 = vld [vmem:[%s306 + $0x24] sm:$0xf]
        %v333 = vld [vmem:[%s306 + $0x28] sm:$0xf]
        %v334 = vld [vmem:[%s306 + $0x2c] sm:$0xf]
        %v335 = vld [vmem:[%s306 + $0x30] sm:$0xf]
        %v336 = vld [vmem:[%s306 + $0x34] sm:$0xf]
        %v337 = vld [vmem:[%s306 + $0x38] sm:$0xf]
        %v338 = vld [vmem:[%s306 + $0x3c] sm:$0xf]
        %v339 = vld [vmem:[%s316] sm:$0xf]
        %v340 = vld [vmem:[%s316 + $0x4] sm:$0xf]
        %v341 = vld [vmem:[%s316 + $0x8] sm:$0xf]
        %v342 = vld [vmem:[%s316 + $0xc] sm:$0xf]
        %v343 = vld [vmem:[%s316 + $0x10] sm:$0xf]
        %v344 = vld [vmem:[%s316 + $0x14] sm:$0xf]
        %v345 = vld [vmem:[%s316 + $0x18] sm:$0xf]
        %v346 = vld [vmem:[%s316 + $0x1c] sm:$0xf]
        %v347 = vld [vmem:[%s316 + $0x20] sm:$0xf]
        %v348 = vld [vmem:[%s316 + $0x24] sm:$0xf]
        %v349 = vld [vmem:[%s316 + $0x28] sm:$0xf]
        %v350 = vld [vmem:[%s316 + $0x2c] sm:$0xf]
        %v351 = vld [vmem:[%s316 + $0x30] sm:$0xf]
        %v352 = vld [vmem:[%s316 + $0x34] sm:$0xf]
        %v353 = vld [vmem:[%s316 + $0x38] sm:$0xf]
        %v354 = vld [vmem:[%s316 + $0x3c] sm:$0xf]
        %v357 = vunpack.c.l.b16 %v321
        %v358 = vunpack.c.l.b16 %v322
        %v359 = vpack.c.b16 %v358, %v357
        %v376 = vunpack.c.l.b16 %v323
        %v377 = vunpack.c.l.b16 %v324
        %v378 = vunpack.c.l.b16 %v325
        %v379 = vunpack.c.l.b16 %v326
        %v380 = vunpack.c.l.b16 %v327
        %v381 = vunpack.c.l.b16 %v328
        %v382 = vunpack.c.l.b16 %v329
        %v383 = vunpack.c.l.b16 %v330
        %v384 = vunpack.c.l.b16 %v331
        %v385 = vunpack.c.l.b16 %v332
        %v386 = vunpack.c.l.b16 %v333
        %v387 = vunpack.c.l.b16 %v334
        %v388 = vunpack.c.l.b16 %v335
        %v389 = vunpack.c.l.b16 %v336
        %v390 = vunpack.c.l.b16 %v337
        %v391 = vunpack.c.l.b16 %v338
        %v392 = vpack.c.b16 %v377, %v376
        %v393 = vpack.c.b16 %v379, %v378
        %v394 = vpack.c.b16 %v381, %v380
        %v395 = vpack.c.b16 %v383, %v382
        %v396 = vpack.c.b16 %v385, %v384
        %v397 = vpack.c.b16 %v387, %v386
        %v398 = vpack.c.b16 %v389, %v388
        %v399 = vpack.c.b16 %v391, %v390
        %vm400 = vcmask 261120
        %v402 = vsel %vm400, %v359, 0
        %v405 = vsel %vm400, %v392, 0
        %v408 = vsel %vm400, %v393, 0
        %v411 = vsel %vm400, %v394, 0
        %v414 = vsel %vm400, %v395, 0
        %v417 = vsel %vm400, %v396, 0
        %v420 = vsel %vm400, %v397, 0
        %v423 = vsel %vm400, %v398, 0
        %v426 = vsel %vm400, %v399, 0
        %428 = vmatprep.subr.bf16.mxu0 0
        %429 = vmatpush1.bf16.xpose.msra.mxu0 %v426
        %430 = vmatprep.subr.bf16.mxu0 0
        %431 = vmatpush1.bf16.xpose.msra.mxu0 %v423
        %432 = vmatprep.subr.bf16.mxu0 0
        %433 = vmatpush1.bf16.xpose.msra.mxu0 %v420
        %434 = vmatprep.subr.bf16.mxu0 0
        %435 = vmatpush1.bf16.xpose.msra.mxu0 %v417
        %436 = vmatprep.subr.bf16.mxu0 0
        %437 = vmatpush1.bf16.xpose.msra.mxu0 %v414
        %438 = vmatprep.subr.bf16.mxu0 0
        %439 = vmatpush1.bf16.xpose.msra.mxu0 %v411
        %440 = vmatprep.subr.bf16.mxu0 0
        %441 = vmatpush1.bf16.xpose.msra.mxu0 %v408
        %442 = vmatprep.subr.bf16.mxu0 0
        %443 = vmatpush1.bf16.xpose.msra.mxu0 %v405
        %444 = vmatprep.subr.bf16.mxu0 0
        %445 = vmatpush2.bf16.xpose.msra.mxu0 0
        %446 = vmatprep.subr.bf16.mxu0 0
        %447 = vmatpush2.bf16.xpose.msra.mxu0 0
        %448 = vmatprep.subr.bf16.mxu0 0
        %449 = vmatpush2.bf16.xpose.msra.mxu0 0
        %450 = vmatprep.subr.bf16.mxu0 0
        %451 = vmatpush2.bf16.xpose.msra.mxu0 0
        %452 = vmatprep.subr.bf16.mxu0 0
        %453 = vmatpush2.bf16.xpose.msra.mxu0 0
        %454 = vmatprep.subr.bf16.mxu0 0
        %455 = vmatpush2.bf16.xpose.msra.mxu0 0
        %456 = vmatprep.subr.bf16.mxu0 0
        %457 = vmatpush2.bf16.xpose.msra.mxu0 0
        %458 = vmatprep.subr.bf16.mxu0 0
        %459 = vmatpush2.bf16.xpose.msra.mxu0 0
        %460 = vmatprep.mubr.bf16.mxu0 0
        %461 = vmatmul.mubr.bf16.gmra.mxu0 %v402
        %v462 = vpop.f32.mrf.mxu0
        %v463 = vadd.f32 0.0, %v462
        %v464 = vpop.f32.mrf.mxu0
        %v465 = vpop.f32.mrf.mxu0
        %v466 = vadd.f32 0.0, %v465
        %v467 = vpop.f32.mrf.mxu0
        %468 = vdwg.mxu0
        %v469 = vlaneseq
        %v470 = vand.u32 %v469, 127
        %s471 = smul.u32 %s29, 128
        %v472 = vstv %s471
        %v473 = vadd.s32 %v470, %v472
        %vm474 = vcmp.lt.s32.totalorder %v473, 8
        %v475 = vsel %vm474, %v463, -1e+30
        %v476 = vsel %vm474, %v466, -1e+30
        %477 = vmax.xlane.f32.xlu0 %v475
        %v478 = vpop.xlane.xlu0 %477
        %479 = vmax.xlane.f32.xlu0 %v476
        %v480 = vpop.xlane.xlu0 %479
        %v481 = vsub.f32 %v475, %v478
        %v482 = vsub.f32 %v476, %v480
        %v483 = vmul.f32 %v481, 1.442695
        %v484 = vpow.pop %v483
        %v485 = vmul.f32 %v482, 1.442695
        %v486 = vpow.pop %v485
        %487 = vadd.xlane.f32.xlu0 %v484
        %v488 = vpop.xlane.xlu0 %487
        %489 = vadd.xlane.f32.xlu0 %v486
        %v490 = vpop.xlane.xlu0 %489
        %v491 = vrcp.pop %v488
        %v492 = vrcp.pop %v490
        %v493 = vmul.f32 %v484, %v491
        %v494 = vmul.f32 %v486, %v492
        %495 = vst [vmem:[%s287] sm:$0xff] %v493
        %496 = vst [vmem:[%s287 + $0x8] sm:$0xff] %v494
        %v497 = vpack.c.bf16 %v494, %v493
        %v514 = vunpack.c.l.b16 %v339
        %v515 = vunpack.c.l.b16 %v340
        %v516 = vunpack.c.l.b16 %v341
        %v517 = vunpack.c.l.b16 %v342
        %v518 = vunpack.c.l.b16 %v343
        %v519 = vunpack.c.l.b16 %v344
        %v520 = vunpack.c.l.b16 %v345
        %v521 = vunpack.c.l.b16 %v346
        %v522 = vunpack.c.l.b16 %v347
        %v523 = vunpack.c.l.b16 %v348
        %v524 = vunpack.c.l.b16 %v349
        %v525 = vunpack.c.l.b16 %v350
        %v526 = vunpack.c.l.b16 %v351
        %v527 = vunpack.c.l.b16 %v352
        %v528 = vunpack.c.l.b16 %v353
        %v529 = vunpack.c.l.b16 %v354
        %v530 = vpack.c.b16 %v515, %v514
        %v531 = vpack.c.b16 %v517, %v516
        %v532 = vpack.c.b16 %v519, %v518
        %v533 = vpack.c.b16 %v521, %v520
        %v534 = vpack.c.b16 %v523, %v522
        %v535 = vpack.c.b16 %v525, %v524
        %v536 = vpack.c.b16 %v527, %v526
        %v537 = vpack.c.b16 %v529, %v528
        %546 = vmatprep.subr.bf16.mxu0 0
        %547 = vmatpush1.bf16.msra.mxu0 %v537
        %548 = vmatprep.subr.bf16.mxu0 0
        %549 = vmatpush1.bf16.msra.mxu0 %v536
        %550 = vmatprep.subr.bf16.mxu0 0
        %551 = vmatpush1.bf16.msra.mxu0 %v535
        %552 = vmatprep.subr.bf16.mxu0 0
        %553 = vmatpush1.bf16.msra.mxu0 %v534
        %554 = vmatprep.subr.bf16.mxu0 0
        %555 = vmatpush1.bf16.msra.mxu0 %v533
        %556 = vmatprep.subr.bf16.mxu0 0
        %557 = vmatpush1.bf16.msra.mxu0 %v532
        %558 = vmatprep.subr.bf16.mxu0 0
        %559 = vmatpush1.bf16.msra.mxu0 %v531
        %560 = vmatprep.subr.bf16.mxu0 0
        %561 = vmatpush1.bf16.msra.mxu0 %v530
        %562 = vmatprep.subr.bf16.mxu0 0
        %563 = vmatpush2.bf16.msra.mxu0 0
        %564 = vmatprep.subr.bf16.mxu0 0
        %565 = vmatpush2.bf16.msra.mxu0 0
        %566 = vmatprep.subr.bf16.mxu0 0
        %567 = vmatpush2.bf16.msra.mxu0 0
        %568 = vmatprep.subr.bf16.mxu0 0
        %569 = vmatpush2.bf16.msra.mxu0 0
        %570 = vmatprep.subr.bf16.mxu0 0
        %571 = vmatpush2.bf16.msra.mxu0 0
        %572 = vmatprep.subr.bf16.mxu0 0
        %573 = vmatpush2.bf16.msra.mxu0 0
        %574 = vmatprep.subr.bf16.mxu0 0
        %575 = vmatpush2.bf16.msra.mxu0 0
        %576 = vmatprep.subr.bf16.mxu0 0
        %577 = vmatpush2.bf16.msra.mxu0 0
        %578 = vmatprep.mubr.bf16.mxu0 0
        %579 = vmatmul.mubr.bf16.gmra.mxu0 %v497
        %v580 = vpop.f32.mrf.mxu0
        %v581 = vadd.f32 0.0, %v580
        %v582 = vpop.f32.mrf.mxu0
        %v583 = vpop.f32.mrf.mxu0
        %v584 = vadd.f32 0.0, %v583
        %v585 = vpop.f32.mrf.mxu0
        %586 = vdwg.mxu0
        %587 = vst.msk [vmem:[%s280] sm:$0xff] %vm400, %v581
        %588 = vst.msk [vmem:[%s280 + $0x8] sm:$0xff] %vm400, %v584
        %s589 = sand.u32 %s135, 1
        %s590 = scalar_lea.sflag [#allocation3], %s589
        %s591 = sand.u32 %s135, 1
        %s592 = smul.addr %s591, 16
        %s593 = scalar_lea.vmem [#allocation2], %s592
        %s594 = sand.u32 %s163, 1
        %s595 = scalar_lea.sflag [#allocation5], %s594
        %s596 = sand.u32 %s163, 1
        %s597 = smul.addr %s596, 16
        %s598 = scalar_lea.vmem [#allocation4], %s597
        // Predicated region
        $region33: #{tpu_custom_call.1} parent=31 // pred_check
          %p599 = pneg %p145
        $region34: #{tpu_custom_call.1} parent=31 // pred_check_branch
          %601 = sbr.rel (%p599) target = $region36
        $region35: #{tpu_custom_call.1} parent=31 // pred_region
          %s602 = smul.u32 2, %s28
          %s604 = ssub.s32 256, 256
          %605 = vsyncadd %s590, %s604
          %s606 = smul.addr %s27, 2
          %s607 = sadd.s32 %s602, %s606
          %s608 = smul.addr %s607, 128
          %s609 = scalar_lea.hbm %s3, %s608
          %s610 = sshll.u32 %s593, 4
          %s611 = int_to_ptr.vmem [resolvable:$true] %s610
          %616 = dma.vmem_to_hbm [thread:$0]  %s611, 256, %s609, %s590, 128, 128, 8
        $region36: #{tpu_custom_call.1} parent=31 // pred_fallthru
          _
        // Predicated region
        $region37: #{tpu_custom_call.1} parent=31 // pred_check
          %p617 = pneg %p173
        $region38: #{tpu_custom_call.1} parent=31 // pred_check_branch
          %619 = sbr.rel (%p617) target = $region40
        $region39: #{tpu_custom_call.1} parent=31 // pred_region
          %s620 = smul.u32 2, %s28
          %s622 = ssub.s32 256, 256
          %623 = vsyncadd %s595, %s622
          %s624 = smul.addr %s27, 2
          %s625 = sadd.s32 %s620, %s624
          %s626 = smul.addr %s625, 128
          %s627 = scalar_lea.hbm %s4, %s626
          %s628 = sshll.u32 %s598, 4
          %s629 = int_to_ptr.vmem [resolvable:$true] %s628
          %634 = dma.vmem_to_hbm [thread:$0]  %s629, 256, %s627, %s595, 128, 128, 8
        $region40: #{tpu_custom_call.1} parent=31 // pred_fallthru
          _
      $region32: #{tpu_custom_call.1} parent=5 // pred_fallthru
        _
      %p635 = scmp.le.s32.totalorder 2, %s17
      // Predicated region
      $region41: #{tpu_custom_call.1} parent=5 // pred_check
        %p636 = pneg %p635
      $region42: #{tpu_custom_call.1} parent=5 // pred_check_branch
        %638 = sbr.rel (%p636) target = $region44
      $region43: #{tpu_custom_call.1} parent=5 // pred_region
        %s639 = ssub.s32 %s17, 2
        // Predicated region
        $region45: #{tpu_custom_call.1} parent=43 // pred_check
          %p640 = pneg %p151
        $region46: #{tpu_custom_call.1} parent=43 // pred_check_branch
          %642 = sbr.rel (%p640) target = $region48
        $region47: #{tpu_custom_call.1} parent=43 // pred_region
          %s643 = sand.u32 %s136, 1
          %s644 = scalar_lea.sflag [#allocation3], %s643
          %s645 = sand.u32 %s136, 1
          %s646 = smul.addr %s645, 16
          %s647 = scalar_lea.vmem [#allocation2], %s646
          %648 = dma.done %s644, 256
        $region48: #{tpu_custom_call.1} parent=43 // pred_fallthru
          _
        // Predicated region
        $region49: #{tpu_custom_call.1} parent=43 // pred_check
          %p649 = pneg %p179
        $region50: #{tpu_custom_call.1} parent=43 // pred_check_branch
          %651 = sbr.rel (%p649) target = $region52
        $region51: #{tpu_custom_call.1} parent=43 // pred_region
          %s652 = sand.u32 %s164, 1
          %s653 = scalar_lea.sflag [#allocation5], %s652
          %s654 = sand.u32 %s164, 1
          %s655 = smul.addr %s654, 16
          %s656 = scalar_lea.vmem [#allocation4], %s655
          %657 = dma.done %s653, 256
        $region52: #{tpu_custom_call.1} parent=43 // pred_fallthru
          _
      $region44: #{tpu_custom_call.1} parent=5 // pred_fallthru
        _
    $region6: #{tpu_custom_call.1} parent=1 // loop_footer
      %s21 = sadd.s32 1, %s17
    $region7: #{tpu_custom_call.1} parent=1 // loop_footer_branch
      %16 = sbr.rel target = $region3
    $region8: #{tpu_custom_call.1} parent=1 // loop_exit
      _
    %658 = vsyncpa [#allocation3], 1
    %s659 = scalar_lea.sflag [#allocation3], 1
    %660 = vsyncpa %s659, 1
    %661 = vsyncpa [#allocation5], 1
    %s662 = scalar_lea.sflag [#allocation5], 1
    %663 = vsyncpa %s662, 1

</llo_original>
